<compile_context>
chip_gen: v5e
topology: v5e:2x2
jax: 0.10.0
libtpu: 0.0.40
codegen_flags: <defaults>
</compile_context>

<pallas_src>
import functools

import jax
import jax.numpy as jnp
from jax.experimental import pallas as pl
from jax.experimental.pallas import tpu as pltpu

LANES = 128


def _row_align(dtype):
    """Sublane packing of the streamed dtype: 8 rows (f32), 16 (bf16), 32 (8-bit)."""
    itemsize = jnp.dtype(dtype).itemsize
    return 8 * max(1, 4 // max(1, itemsize))


def _default_partitions():
    """2 only on dual-TensorCore (v7x-class) chips, else 1."""
    try:
        kind = jax.devices()[0].device_kind.lower()
    except Exception:
        return 1
    return 2 if "7" in kind else 1


def _gen_loss_kernel(x_ref, o_ref, *, tile_rows, n_rows, tiles_per_part):
    p = pl.program_id(0)          # partition (TensorCore shard on v7x)
    t = pl.program_id(1)          # streaming / reduction step within partition

    @pl.when(t == 0)
    def _init():
        o_ref[...] = jnp.zeros_like(o_ref)

    x = x_ref[...].astype(jnp.float32)
    row0 = (p * tiles_per_part + t) * tile_rows
    groups = tile_rows // 8

    # Hot path: block fully in range -> pure elementwise VPU work + vreg adds.
    @pl.when(row0 + tile_rows <= n_rows)
    def _full():
        d = x - 1.0
        o_ref[...] += (d * d).reshape(groups, 8, LANES).sum(axis=0)

    # Ragged / logically-empty edge blocks: mask invalid rows before squaring.
    @pl.when(row0 + tile_rows > n_rows)
    def _tail():
        rows = jax.lax.broadcasted_iota(jnp.int32, x.shape, 0) + row0
        d = jnp.where(rows < n_rows, x - 1.0, 0.0)
        o_ref[...] += (d * d).reshape(groups, 8, LANES).sum(axis=0)


def generator_loss(prob_fake_repr_is_real, *, tile_rows=4096, num_partitions=None):
    """LSGAN generator loss: 0.5 * mean((x - 1)^2) over all elements."""
    x = prob_fake_repr_is_real
    n_elems = x.size
    flat = jnp.ravel(x)                         # reshape only; keep native dtype

    n_main = (n_elems // LANES) * LANES          # 128-aligned prefix
    m = n_main // LANES
    row_align = _row_align(flat.dtype)

    # Ragged tail (< 128 elements): tiny jnp expression, never a full-input pad.
    if n_main < n_elems:
        tail = flat[n_main:].astype(jnp.float32)
        tail_sum = jnp.sum((tail - 1.0) ** 2)
    else:
        tail_sum = jnp.float32(0.0)

    if m < row_align:
        # Degenerate small input (< one sublane-packed group): pure jnp path.
        if n_main:
            main = flat[:n_main].astype(jnp.float32)
            main_sum = jnp.sum((main - 1.0) ** 2)
        else:
            main_sum = jnp.float32(0.0)
        return (main_sum + tail_sum) * (0.5 / n_elems)

    slab = flat[:n_main].reshape(m, LANES)

    # Clamp the tile to the dtype-aligned row count so small inputs don't DMA
    # or allocate more than needed; keep it a multiple of the sublane packing.
    m_up = ((m + row_align - 1) // row_align) * row_align
    tile_rows = max(row_align, min(tile_rows, m_up))
    tile_rows = ((tile_rows + row_align - 1) // row_align) * row_align
    n_blocks = pl.cdiv(m, tile_rows)

    if num_partitions is None:
        num_partitions = _default_partitions()
    n_part = max(1, min(num_partitions, n_blocks))
    tiles_per_part = pl.cdiv(n_blocks, n_part)

    def x_index_map(p, t):
        # Clamp so trailing (logically empty) blocks never DMA out of bounds;
        # their contribution is masked to zero inside the kernel.
        return (jnp.minimum(p * tiles_per_part + t, n_blocks - 1), 0)

    partials = pl.pallas_call(
        functools.partial(
            _gen_loss_kernel,
            tile_rows=tile_rows,
            n_rows=m,
            tiles_per_part=tiles_per_part,
        ),
        out_shape=jax.ShapeDtypeStruct((n_part * 8, LANES), jnp.float32),
        grid_spec=pltpu.PrefetchScalarGridSpec(
            num_scalar_prefetch=0,
            grid=(n_part, tiles_per_part),
            in_specs=[pl.BlockSpec((tile_rows, LANES), x_index_map)],
            out_specs=pl.BlockSpec((8, LANES), lambda p, t: (p, 0)),
        ),
        compiler_params=pltpu.CompilerParams(
            dimension_semantics=("parallel", "arbitrary"),
        ),
    )(slab)

    # Tiny final reduction over the (n_part*8, 128) partial-sum slab (~4-8 KiB).
    return (jnp.sum(partials) + tail_sum) * (0.5 / n_elems)


def generator_loss_ref(x):
    x = x.astype(jnp.float32)
    return jnp.mean((x - 1.0) ** 2) * 0.5


if __name__ == "__main__":
    key = jax.random.PRNGKey(0)
    f = jax.jit(generator_loss)

    # Discriminator output on fake samples, NCHW-like: [B, C, H, W] (128-aligned).
    k1, k2 = jax.random.split(key)
    x1 = jax.random.uniform(k1, (2, 4, 16, 16), dtype=jnp.float32)
    loss1 = jax.block_until_ready(f(x1))
    ref1 = jax.block_until_ready(generator_loss_ref(x1))
    assert jnp.allclose(loss1, ref1, rtol=1e-6, atol=1e-6), (loss1, ref1)

    # Unaligned size: exercises the in-kernel row mask and the wrapper lane tail.
    x2 = jax.random.uniform(k2, (3, 5, 7, 11), dtype=jnp.float32)
    loss2 = jax.block_until_ready(jax.jit(generator_loss)(x2))
    ref2 = jax.block_until_ready(generator_loss_ref(x2))
    assert jnp.allclose(loss2, ref2, rtol=1e-6, atol=1e-6), (loss2, ref2)

    print("KERNEL_OK")
</pallas_src>

<mosaic_0001>
module attributes {stable_mosaic.version = 11 : i64} {
  func.func @_gen_loss_kernel(%arg0: i32, %arg1: i32, %arg2: memref<16x128xf32, #tpu.memory_space<vmem>>, %arg3: memref<8x128xf32, #tpu.memory_space<vmem>>) attributes {dimension_semantics = [#tpu.dimension_semantics<parallel>, #tpu.dimension_semantics<arbitrary>], iteration_bounds = array<i64: 1, 1>, scalar_prefetch = 0 : i64, scratch_operands = 0 : i64, tpu.core_type = #tpu.core_type<tc>, window_params = [{transform_indices = @transform_0, window_bounds = array<i64: 16, 128>}, {transform_indices = @transform_1, window_bounds = array<i64: 8, 128>}]} {
    %c0_i32 = arith.constant 0 : i32
    %0 = arith.cmpi eq, %arg1, %c0_i32 : i32
    %1 = arith.extui %0 : i1 to i32
    %c0_i32_0 = arith.constant 0 : i32
    %2 = arith.cmpi ne, %1, %c0_i32_0 : i32
    scf.if %2 {
      %cst = arith.constant 0.000000e+00 : f32
      %15 = vector.broadcast %cst : f32 to vector<8x128xf32>
      %c0_8 = arith.constant 0 : index
      %c0_9 = arith.constant 0 : index
      %16 = vector.load %arg3[%c0_8, %c0_9] : memref<8x128xf32, #tpu.memory_space<vmem>>, vector<8x128xf32>
      tpu.vector_store %arg3[%c0_8, %c0_9], %15 {strides = array<i32>} : memref<8x128xf32, #tpu.memory_space<vmem>>, vector<8x128xf32>,
    } else {
    }
    %c0 = arith.constant 0 : index
    %c0_1 = arith.constant 0 : index
    %3 = vector.load %arg2[%c0, %c0_1] : memref<16x128xf32, #tpu.memory_space<vmem>>, vector<16x128xf32>
    %c1_i32 = arith.constant 1 : i32
    %4 = arith.muli %arg0, %c1_i32 : i32
    %5 = arith.addi %4, %arg1 : i32
    %c16_i32 = arith.constant 16 : i32
    %6 = arith.muli %5, %c16_i32 : i32
    %c16_i32_2 = arith.constant 16 : i32
    %7 = arith.addi %6, %c16_i32_2 : i32
    %c16_i32_3 = arith.constant 16 : i32
    %8 = arith.cmpi sle, %7, %c16_i32_3 : i32
    %9 = arith.extui %8 : i1 to i32
    %c0_i32_4 = arith.constant 0 : i32
    %10 = arith.cmpi ne, %9, %c0_i32_4 : i32
    scf.if %10 {
      %cst = arith.constant 1.000000e+00 : f32
      %15 = vector.broadcast %cst : f32 to vector<16x128xf32>
      %16 = arith.subf %3, %15 : vector<16x128xf32>
      %c0_8 = arith.constant 0 : index
      %c0_9 = arith.constant 0 : index
      %17 = vector.load %arg3[%c0_8, %c0_9] : memref<8x128xf32, #tpu.memory_space<vmem>>, vector<8x128xf32>
      %18 = arith.mulf %16, %16 : vector<16x128xf32>
      %19 = vector.shape_cast %18 : vector<16x128xf32> to vector<2x8x128xf32>
      %cst_10 = arith.constant dense<0.000000e+00> : vector<8x128xf32>
      %20 = vector.multi_reduction <add>, %19, %cst_10 [0] : vector<2x8x128xf32> to vector<8x128xf32>
      %21 = arith.addf %17, %20 : vector<8x128xf32>
      %c0_11 = arith.constant 0 : index
      %c0_12 = arith.constant 0 : index
      %22 = vector.load %arg3[%c0_11, %c0_12] : memref<8x128xf32, #tpu.memory_space<vmem>>, vector<8x128xf32>
      tpu.vector_store %arg3[%c0_11, %c0_12], %21 {strides = array<i32>} : memref<8x128xf32, #tpu.memory_space<vmem>>, vector<8x128xf32>,
    } else {
    }
    %c16_i32_5 = arith.constant 16 : i32
    %11 = arith.addi %6, %c16_i32_5 : i32
    %c16_i32_6 = arith.constant 16 : i32
    %12 = arith.cmpi sgt, %11, %c16_i32_6 : i32
    %13 = arith.extui %12 : i1 to i32
    %c0_i32_7 = arith.constant 0 : i32
    %14 = arith.cmpi ne, %13, %c0_i32_7 : i32
    scf.if %14 {
      %15 = tpu.iota {dimensions = array<i32: 0>} : vector<16x128xi32>
      %16 = vector.broadcast %6 : i32 to vector<16x128xi32>
      %17 = arith.addi %15, %16 : vector<16x128xi32>
      %c16_i32_8 = arith.constant 16 : i32
      %18 = vector.broadcast %c16_i32_8 : i32 to vector<16x128xi32>
      %19 = arith.cmpi slt, %17, %18 : vector<16x128xi32>
      %cst = arith.constant 1.000000e+00 : f32
      %20 = vector.broadcast %cst : f32 to vector<16x128xf32>
      %21 = arith.subf %3, %20 : vector<16x128xf32>
      %cst_9 = arith.constant 0.000000e+00 : f32
      %22 = vector.broadcast %cst_9 : f32 to vector<16x128xf32>
      %23 = arith.select %19, %21, %22 : vector<16x128xi1>, vector<16x128xf32>
      %c0_10 = arith.constant 0 : index
      %c0_11 = arith.constant 0 : index
      %24 = vector.load %arg3[%c0_10, %c0_11] : memref<8x128xf32, #tpu.memory_space<vmem>>, vector<8x128xf32>
      %25 = arith.mulf %23, %23 : vector<16x128xf32>
      %26 = vector.shape_cast %25 : vector<16x128xf32> to vector<2x8x128xf32>
      %cst_12 = arith.constant dense<0.000000e+00> : vector<8x128xf32>
      %27 = vector.multi_reduction <add>, %26, %cst_12 [0] : vector<2x8x128xf32> to vector<8x128xf32>
      %28 = arith.addf %24, %27 : vector<8x128xf32>
      %c0_13 = arith.constant 0 : index
      %c0_14 = arith.constant 0 : index
      %29 = vector.load %arg3[%c0_13, %c0_14] : memref<8x128xf32, #tpu.memory_space<vmem>>, vector<8x128xf32>
      tpu.vector_store %arg3[%c0_13, %c0_14], %28 {strides = array<i32>} : memref<8x128xf32, #tpu.memory_space<vmem>>, vector<8x128xf32>,
    } else {
    }
    return
  }
  func.func @transform_0(%arg0: i32, %arg1: i32) -> (i32, i32) {
    %c1_i32 = arith.constant 1 : i32
    %0 = arith.muli %arg0, %c1_i32 : i32
    %1 = arith.addi %0, %arg1 : i32
    %c0_i32 = arith.constant 0 : i32
    %2 = arith.minsi %1, %c0_i32 : i32
    %c0_i32_0 = arith.constant 0 : i32
    %c0_i32_1 = arith.constant 0 : i32
    return %2, %c0_i32_0 : i32, i32
  }
  func.func @transform_1(%arg0: i32, %arg1: i32) -> (i32, i32) {
    %c0_i32 = arith.constant 0 : i32
    %c0_i32_0 = arith.constant 0 : i32
    return %arg0, %c0_i32 : i32, i32
  }
}

</mosaic_0001>

<llo_original>
// kernel: generator_loss.1
$region0: #{generator_loss.1}
  #allocation0 [shape = 'u32[]', space=smem, size = 0x4, offset = 0x4, fixed_abs, tag = 'smem constant byte address 0x4 - core index']
  #allocation1 [shape = 'u32[72,128]{1,0:T(1,128)}', space=vmem, size = 0x9000, scoped, tag = 'internal scratch']
  %s0 = inlined_call_operand.vmem [shape: f32[16,128], index: 0, kind: input, shape index: {}]
  %s1 = inlined_call_operand.vmem [shape: f32[8,128], index: 1, kind: output, shape index: {}]
  %s2 = sld [smem:[#allocation0]]
  $region26: #{generator_loss.1} parent=0
    _
  %s4 = ssub.s32 1, %s2
  %s5 = scalar_select 0, %s4, %s2
  // Predicated region
  $region2: #{generator_loss.1} parent=0 // pred_check
    _
  $region3: #{generator_loss.1} parent=0 // pred_check_branch
    %7 = sbr.rel (0) target = $region5
  $region4: #{generator_loss.1} parent=0 // pred_region
    %s8 = sadd.s32 0, 0
    %p9 = scmp.lt.s32.totalorder %s8, 0
    %s10 = scalar_select %p9, %s8, 0
    %s11 = smul.u32 2, %s10
    %p12 = scmp.lt.s32.totalorder %s11, 1
    %s13 = scalar_select %p12, %s11, 1
    %s14 = smul.addr %s13, 8
    %s15 = scalar_lea.vmem %s0, %s14
    %s16 = sadd.s32 0, 0
    %p17 = scmp.lt.s32.totalorder %s16, 0
    %s18 = scalar_select %p17, %s16, 0
    %s19 = smul.u32 2, %s18
  $region5: #{generator_loss.1} parent=0 // pred_fallthru
    _
  %s20 = sadd.s32 0, 0
  %p21 = scmp.lt.s32.totalorder %s20, 0
  %s22 = scalar_select %p21, %s20, 0
  %s23 = smul.u32 2, %s22
  %p24 = scmp.lt.s32.totalorder %s23, 1
  %s25 = scalar_select %p24, %s23, 1
  %s26 = smul.addr %s25, 8
  %s27 = scalar_lea.vmem %s0, %s26
  %s28 = sadd.s32 0, 0
  %p29 = scmp.lt.s32.totalorder %s28, 0
  %s30 = scalar_select %p29, %s28, 0
  %s31 = smul.u32 2, %s30
  %p32 = scmp.lt.s32.totalorder %s31, 1
  %s33 = scalar_select %p32, %s31, 1
  %s34 = smul.addr %s33, 8
  %s35 = scalar_lea.vmem %s0, %s34
  %s36 = sadd.s32 0, 0
  %p37 = scmp.lt.s32.totalorder %s36, 0
  %s38 = scalar_select %p37, %s36, 0
  %s39 = smul.u32 2, %s38
  %p40 = scmp.eq.s32.totalorder 0, 0
  // Predicated region
  $region6: #{generator_loss.1} parent=0 // pred_check
    %p41 = pneg %p40
  $region7: #{generator_loss.1} parent=0 // pred_check_branch
    %43 = sbr.rel (%p41) target = $region9
  $region8: #{generator_loss.1} parent=0 // pred_region
    %44 = vst [vmem:[%s1] sm:$0xff] 0.0
  $region9: #{generator_loss.1} parent=0 // pred_fallthru
    _
  %v45 = vld [vmem:[%s35] sm:$0xff]
  %v46 = vld [vmem:[%s35 + $0x8] sm:$0xff]
  %s47 = sadd.s32 0, 0
  %s48 = smul.u32 %s47, 16
  %s49 = sadd.s32 %s48, 16
  %p50 = scmp.le.s32.totalorder %s49, 16
  // Predicated region
  $region10: #{generator_loss.1} parent=0 // pred_check
    %p51 = pneg %p50
  $region11: #{generator_loss.1} parent=0 // pred_check_branch
    %53 = sbr.rel (%p51) target = $region13
  $region12: #{generator_loss.1} parent=0 // pred_region
    %v54 = vsub.f32 %v45, 1.0
    %v55 = vsub.f32 %v46, 1.0
    %v56 = vld [vmem:[%s1] sm:$0xff]
    %v57 = vmul.f32 %v54, %v54
    %v58 = vmul.f32 %v55, %v55
    %v59 = vadd.f32 %v57, %v58
    %v60 = vadd.f32 %v56, %v59
    %61 = vst [vmem:[%s1] sm:$0xff] %v60
  $region13: #{generator_loss.1} parent=0 // pred_fallthru
    _
  %p62 = scmp.gt.s32.totalorder %s49, 16
  // Predicated region
  $region14: #{generator_loss.1} parent=0 // pred_check
    %p63 = pneg %p62
  $region15: #{generator_loss.1} parent=0 // pred_check_branch
    %65 = sbr.rel (%p63) target = $region17
  $region16: #{generator_loss.1} parent=0 // pred_region
    %v66 = vlaneseq
    %v67 = vshrl.u32 %v66, 7
    %v68 = vadd.s32 %v67, 8
    %v69 = vstv %s48
    %v70 = vadd.s32 %v67, %v69
    %v71 = vadd.s32 %v68, %v69
    %vm72 = vcmp.lt.s32.totalorder %v70, 16
    %vm73 = vcmp.lt.s32.totalorder %v71, 16
    %v74 = vsub.f32 %v45, 1.0
    %v75 = vsub.f32 %v46, 1.0
    %v76 = vsel %vm72, %v74, 0.0
    %v77 = vsel %vm73, %v75, 0.0
    %v78 = vld [vmem:[%s1] sm:$0xff]
    %v79 = vmul.f32 %v76, %v76
    %v80 = vmul.f32 %v77, %v77
    %v81 = vadd.f32 %v79, %v80
    %v82 = vadd.f32 %v78, %v81
    %83 = vst [vmem:[%s1] sm:$0xff] %v82
  $region17: #{generator_loss.1} parent=0 // pred_fallthru
    _
  // Predicated region
  $region18: #{generator_loss.1} parent=0 // pred_check
    _
  $region19: #{generator_loss.1} parent=0 // pred_check_branch
    %85 = sbr.rel (0) target = $region21
  $region20: #{generator_loss.1} parent=0 // pred_region
    _
  $region21: #{generator_loss.1} parent=0 // pred_fallthru
    _
  // Predicated region
  $region22: #{generator_loss.1} parent=0 // pred_check
    _
  $region23: #{generator_loss.1} parent=0 // pred_check_branch
    %87 = sbr.rel (0) target = $region25
  $region24: #{generator_loss.1} parent=0 // pred_region
    _
  $region25: #{generator_loss.1} parent=0 // pred_fallthru
    _

</llo_original>
